<compile_context>
chip_gen: v7x
topology: tpu7x:2x2x1
jax: 0.10.0
libtpu: 0.0.40
codegen_flags: <defaults>
</compile_context>

<pallas_src>
import numpy as np
import jax
import jax.numpy as jnp
from jax.experimental import pallas as pl
from jax.experimental.pallas import tpu as pltpu


_LANE = 128
_SUBLANE = 8


def _round_up(a, m):
    return -(-a // m) * m


def _adaptive_pool_matrix_flat(H, W, out_h):
    """P[h*W + w, i] = 1/(bin_i_size * W) if H-row h falls in adaptive bin i (out_w=1)."""
    P = np.zeros((H * W, out_h), dtype=np.float32)
    for i in range(out_h):
        start = (i * H) // out_h
        end = -(-((i + 1) * H) // out_h)          # ceil
        P[start * W:end * W, i] = 1.0 / ((end - start) * W)
    return P


def _se_kernel(x_ref, m1_ref, b1_ref, w2T_ref, b2_ref, o_ref):
    # x_ref:   (TILE_ROWS, HW_pad)  streamed input tile (native dtype)
    # m1_ref:  (HW_pad, hidden)     host-fused (adaptive pool @ W1^T), resident
    # b1_ref:  (1, hidden)          f32
    # w2T_ref: (hidden, channel)    resident
    # b2_ref:  (1, channel)         f32
    h = jnp.dot(x_ref[...], m1_ref[...],
                preferred_element_type=jnp.float32) + b1_ref[...]
    h = jnp.maximum(h, 0.0)                                        # ReLU
    y = jnp.dot(h.astype(w2T_ref.dtype), w2T_ref[...],
                preferred_element_type=jnp.float32) + b2_ref[...]
    o_ref[...] = jax.nn.sigmoid(y).astype(o_ref.dtype)


def _tpu_vmem_and_cores():
    """(physical VMEM per core, safe scoped-VMEM ceiling, TensorCores per chip)."""
    phys = 128 << 20
    cores = 1
    try:
        info = pltpu.get_tpu_info()
        phys = int(getattr(info, "vmem_capacity_bytes", phys) or phys)
        for name in ("num_cores", "core_count", "num_tensorcores", "tensorcore_count"):
            v = getattr(info, name, None)
            if isinstance(v, int) and v > 0:
                cores = v
                break
        else:
            # Heuristic: 64 MiB-per-TC parts (v7x-class) have 2 TCs per chip.
            cores = 2 if phys <= (64 << 20) else 1
    except Exception:
        pass
    limit_cap = (30 << 20) if phys <= (64 << 20) else (56 << 20)
    return phys, limit_cap, cores


def _pick_tile_rows(nc, row_bytes, x_budget_bytes,
                    target_bytes=12 << 20, min_steps=8, min_tile_bytes=1 << 20):
    """Rows per streamed x tile: bytes-capped (~12 MiB/buffer), multiple of 8,
    keeping >= min_steps grid steps for pipelining while tiles stay >= ~1 MiB."""
    if nc <= _SUBLANE:
        return nc
    per_buf = max(min_tile_bytes, min(target_bytes, x_budget_bytes // 2))
    t = max(_SUBLANE, (per_buf // max(1, row_bytes)) // _SUBLANE * _SUBLANE)
    if nc <= t:
        return nc                                  # whole problem fits one resident tile
    t_steps = max(_SUBLANE, (nc // min_steps) // _SUBLANE * _SUBLANE)
    t_floor = max(_SUBLANE, (min_tile_bytes // max(1, row_bytes)) // _SUBLANE * _SUBLANE)
    return max(_SUBLANE, min(t, max(t_steps, t_floor)))


def se_layer_pallas(x, W1, b1, W2, b2, channel):
    N, C, H, Wd = x.shape
    hidden = W1.shape[0]
    NC, HW = N * C, H * Wd
    HW_p = _round_up(HW, _LANE)                    # lane-dense K for streamed tiles

    # Weight dtype matches activation dtype (bf16 x -> bf16 weights); biases and
    # MXU accumulation stay f32.
    param_dtype = jnp.bfloat16 if x.dtype == jnp.bfloat16 else jnp.float32
    out_dtype = x.dtype

    # Host-side fusion: adaptive-pool matrix folded into FC1 (exact; ReLU after).
    P_full = jnp.asarray(_adaptive_pool_matrix_flat(H, Wd, channel))       # (HW, channel)
    M1 = P_full @ W1.astype(jnp.float32).T                                 # (HW, hidden)
    if HW_p != HW:                                                         # pad K to 128 lanes
        M1 = jnp.pad(M1, ((0, HW_p - HW), (0, 0)))
    M1 = M1.astype(param_dtype)
    W2T = W2.astype(jnp.float32).T.astype(param_dtype)                     # (hidden, channel)
    b1r = b1.astype(jnp.float32).reshape(1, hidden)
    b2r = b2.astype(jnp.float32).reshape(1, channel)

    x2 = x.reshape(NC, HW)                         # native dtype, no wrapper upcast
    if HW_p != HW:
        x2 = jnp.pad(x2, ((0, 0), (0, HW_p - HW)))

    x_item = x2.dtype.itemsize
    o_item = jnp.dtype(out_dtype).itemsize
    p_item = jnp.dtype(param_dtype).itemsize

    _, limit_cap, n_cores = _tpu_vmem_and_cores()

    # 128-lane / 8-sublane padded constant footprint (counted double-buffered so
    # the budget still holds if the single-buffer request is rejected).
    const_bytes = (HW_p * _round_up(hidden, _LANE) * p_item
                   + _round_up(hidden, _SUBLANE) * _round_up(channel, _LANE) * p_item
                   + 2 * _SUBLANE * _LANE * 4)
    headroom = 2 << 20

    x_budget = max(1 << 20, limit_cap - 2 * const_bytes - headroom)
    tile_rows = _pick_tile_rows(NC, HW_p * x_item, x_budget)

    def footprint(tr):
        x_blk = tr * HW_p * x_item
        o_blk = _round_up(tr, _SUBLANE) * _round_up(channel, _LANE) * o_item
        h_blk = _round_up(tr, _SUBLANE) * _round_up(max(hidden, channel), _LANE) * 4
        return 2 * (x_blk + o_blk) + 2 * const_bytes + 2 * h_blk

    while tile_rows > _SUBLANE and footprint(tile_rows) + headroom > limit_cap:
        tile_rows = max(_SUBLANE, (tile_rows // 2) // _SUBLANE * _SUBLANE)

    vmem_limit = int(max(16 << 20, min(limit_cap, footprint(tile_rows) + headroom)))

    grid_steps = pl.cdiv(NC, tile_rows)
    grid = (grid_steps,)

    cost = pl.CostEstimate(
        flops=2 * NC * HW_p * hidden + 2 * NC * hidden * channel,
        transcendentals=NC * channel,
        bytes_accessed=(NC * HW_p * x_item + NC * channel * o_item + const_bytes),
    )

    def build(dim_sem, const_mode):
        const_kw = {} if const_mode is None else {"pipeline_mode": const_mode}
        in_specs = [
            pl.BlockSpec((tile_rows, HW_p), lambda i: (i, 0)),              # x: streamed row tile
            pl.BlockSpec((HW_p, hidden), lambda i: (0, 0), **const_kw),     # M1: resident constant
            pl.BlockSpec((1, hidden), lambda i: (0, 0), **const_kw),        # b1
            pl.BlockSpec((hidden, channel), lambda i: (0, 0), **const_kw),  # W2^T
            pl.BlockSpec((1, channel), lambda i: (0, 0), **const_kw),       # b2
        ]
        return pl.pallas_call(
            _se_kernel,
            out_shape=jax.ShapeDtypeStruct((NC, channel), out_dtype),
            grid=grid,
            in_specs=in_specs,
            out_specs=pl.BlockSpec((tile_rows, channel), lambda i: (i, 0)),
            compiler_params=pltpu.CompilerParams(
                dimension_semantics=(dim_sem,),
                vmem_limit_bytes=vmem_limit),
            cost_estimate=cost,
        )

    # Preferred configurations first; fall back to the known-good baseline if a
    # feature (CORE_PARALLEL, Buffered(1)) is rejected by the installed Pallas.
    configs = []
    core_parallel = getattr(pltpu, "CORE_PARALLEL", None)
    if core_parallel is not None and n_cores > 1 and grid_steps >= n_cores:
        configs.append((core_parallel, pl.Buffered(1)))
    configs.append(("parallel", pl.Buffered(1)))
    configs.append(("parallel", None))

    tracer_cls = getattr(jax.core, "Tracer", ())
    out = None
    last_err = None
    for dim_sem, const_mode in configs:
        try:
            out = build(dim_sem, const_mode)(x2, M1, b1r, W2T, b2r)
            if not isinstance(out, tracer_cls):
                jax.block_until_ready(out)          # surface deferred failures too
            break
        except Exception as e:                      # fall back to next config
            last_err = e
            out = None
    if out is None:
        raise last_err

    return out.reshape(N, C, channel)


def se_layer_ref(x, W1, b1, W2, b2, channel):
    """Pure-JAX reference (mirrors the PyTorch module)."""
    N, C, H, Wd = x.shape
    P = jnp.asarray(_adaptive_pool_matrix_flat(H, Wd, channel))   # (H*W, channel)
    xf = x.astype(jnp.float32).reshape(N, C, H * Wd)
    pooled = jnp.einsum('nck,ki->nci', xf, P)                     # adaptive avg pool
    h = jax.nn.relu(jnp.einsum('nci,ji->ncj', pooled, W1.astype(jnp.float32))
                    + b1.astype(jnp.float32))
    return jax.nn.sigmoid(jnp.einsum('ncj,ij->nci', h, W2.astype(jnp.float32))
                          + b2.astype(jnp.float32))


if __name__ == "__main__":
    # SELayer(channel=8, reduction=2)  ->  hidden = channel // reduction = 4
    N, C, H, W = 2, 8, 16, 16
    channel, reduction = 8, 2
    hidden = channel // reduction

    key = jax.random.PRNGKey(0)
    kx, k1, k2, k3, k4 = jax.random.split(key, 5)
    x = jax.random.normal(kx, (N, C, H, W), dtype=jnp.float32)

    # Deterministic synthetic parameters (PyTorch Linear layout: (out, in)).
    W1 = 0.1 * jax.random.normal(k1, (hidden, channel), dtype=jnp.float32)
    b1 = 0.1 * jax.random.normal(k2, (hidden,), dtype=jnp.float32)
    W2 = 0.1 * jax.random.normal(k3, (channel, hidden), dtype=jnp.float32)
    b2 = 0.1 * jax.random.normal(k4, (channel,), dtype=jnp.float32)

    out = se_layer_pallas(x, W1, b1, W2, b2, channel)
    out = jax.block_until_ready(out)

    ref = se_layer_ref(x, W1, b1, W2, b2, channel)
    assert out.shape == (N, C, channel), out.shape
    np.testing.assert_allclose(np.asarray(out), np.asarray(ref), rtol=1e-5, atol=1e-5)

    print("KERNEL_OK")
</pallas_src>

<mosaic_0001>
module attributes {stable_mosaic.version = 11 : i64} {
  func.func @_se_kernel(%arg0: i32, %arg1: memref<16x256xf32, #tpu.memory_space<vmem>>, %arg2: memref<256x4xf32, #tpu.memory_space<vmem>>, %arg3: memref<1x4xf32, #tpu.memory_space<vmem>>, %arg4: memref<4x8xf32, #tpu.memory_space<vmem>>, %arg5: memref<1x8xf32, #tpu.memory_space<vmem>>, %arg6: memref<16x8xf32, #tpu.memory_space<vmem>>) attributes {dimension_semantics = [#tpu.dimension_semantics<parallel>], iteration_bounds = array<i64: 1>, scalar_prefetch = 0 : i64, scratch_operands = 0 : i64, tpu.core_type = #tpu.core_type<tc>, window_params = [{transform_indices = @transform_0, window_bounds = array<i64: 16, 256>}, {pipeline_mode = #tpu.pipeline_mode<synchronous>, transform_indices = @transform_1, window_bounds = array<i64: 256, 4>}, {pipeline_mode = #tpu.pipeline_mode<synchronous>, transform_indices = @transform_2, window_bounds = array<i64: 1, 4>}, {pipeline_mode = #tpu.pipeline_mode<synchronous>, transform_indices = @transform_3, window_bounds = array<i64: 4, 8>}, {pipeline_mode = #tpu.pipeline_mode<synchronous>, transform_indices = @transform_4, window_bounds = array<i64: 1, 8>}, {transform_indices = @transform_5, window_bounds = array<i64: 16, 8>}]} {
    %c0 = arith.constant 0 : index
    %c0_0 = arith.constant 0 : index
    %0 = vector.load %arg1[%c0, %c0_0] : memref<16x256xf32, #tpu.memory_space<vmem>>, vector<16x256xf32>
    %c0_1 = arith.constant 0 : index
    %c0_2 = arith.constant 0 : index
    %1 = vector.load %arg2[%c0_1, %c0_2] : memref<256x4xf32, #tpu.memory_space<vmem>>, vector<256x4xf32>
    %cst = arith.constant dense<0.000000e+00> : vector<16x4xf32>
    %2 = tpu.matmul %0, %1, %cst {dimension_numbers = #tpu.dot_dimension_numbers<[1], [0], [0], [1], [0, 0, 1, 1], [], []>} : vector<16x256xf32>, vector<256x4xf32>, vector<16x4xf32> -> vector<16x4xf32>
    %c0_3 = arith.constant 0 : index
    %c0_4 = arith.constant 0 : index
    %3 = vector.load %arg3[%c0_3, %c0_4] : memref<1x4xf32, #tpu.memory_space<vmem>>, vector<1x4xf32>
    %4 = vector.broadcast %3 : vector<1x4xf32> to vector<16x4xf32>
    %5 = arith.addf %2, %4 : vector<16x4xf32>
    %cst_5 = arith.constant 0.000000e+00 : f32
    %6 = vector.broadcast %cst_5 : f32 to vector<16x4xf32>
    %7 = arith.maximumf %5, %6 : vector<16x4xf32>
    %c0_6 = arith.constant 0 : index
    %c0_7 = arith.constant 0 : index
    %8 = vector.load %arg4[%c0_6, %c0_7] : memref<4x8xf32, #tpu.memory_space<vmem>>, vector<4x8xf32>
    %cst_8 = arith.constant dense<0.000000e+00> : vector<16x8xf32>
    %9 = tpu.matmul %7, %8, %cst_8 {dimension_numbers = #tpu.dot_dimension_numbers<[1], [0], [0], [1], [0, 0, 1, 1], [], []>} : vector<16x4xf32>, vector<4x8xf32>, vector<16x8xf32> -> vector<16x8xf32>
    %c0_9 = arith.constant 0 : index
    %c0_10 = arith.constant 0 : index
    %10 = vector.load %arg5[%c0_9, %c0_10] : memref<1x8xf32, #tpu.memory_space<vmem>>, vector<1x8xf32>
    %11 = vector.broadcast %10 : vector<1x8xf32> to vector<16x8xf32>
    %12 = arith.addf %9, %11 : vector<16x8xf32>
    %13 = arith.negf %12 : vector<16x8xf32>
    %14 = math.exp %13 : vector<16x8xf32>
    %cst_11 = arith.constant 1.000000e+00 : f32
    %15 = vector.broadcast %cst_11 : f32 to vector<16x8xf32>
    %16 = arith.addf %15, %14 : vector<16x8xf32>
    %17 = arith.divf %15, %16 : vector<16x8xf32>
    %c0_12 = arith.constant 0 : index
    %c0_13 = arith.constant 0 : index
    %18 = vector.load %arg6[%c0_12, %c0_13] : memref<16x8xf32, #tpu.memory_space<vmem>>, vector<16x8xf32>
    tpu.vector_store %arg6[%c0_12, %c0_13], %17 {strides = array<i32>} : memref<16x8xf32, #tpu.memory_space<vmem>>, vector<16x8xf32>,
    return
  }
  func.func @transform_0(%arg0: i32) -> (i32, i32) {
    %c0_i32 = arith.constant 0 : i32
    %c0_i32_0 = arith.constant 0 : i32
    return %arg0, %c0_i32 : i32, i32
  }
  func.func @transform_1(%arg0: i32) -> (i32, i32) {
    %c0_i32 = arith.constant 0 : i32
    %c0_i32_0 = arith.constant 0 : i32
    %c0_i32_1 = arith.constant 0 : i32
    return %c0_i32, %c0_i32_0 : i32, i32
  }
  func.func @transform_2(%arg0: i32) -> (i32, i32) {
    %c0_i32 = arith.constant 0 : i32
    %c0_i32_0 = arith.constant 0 : i32
    %c0_i32_1 = arith.constant 0 : i32
    return %c0_i32, %c0_i32_0 : i32, i32
  }
  func.func @transform_3(%arg0: i32) -> (i32, i32) {
    %c0_i32 = arith.constant 0 : i32
    %c0_i32_0 = arith.constant 0 : i32
    %c0_i32_1 = arith.constant 0 : i32
    return %c0_i32, %c0_i32_0 : i32, i32
  }
  func.func @transform_4(%arg0: i32) -> (i32, i32) {
    %c0_i32 = arith.constant 0 : i32
    %c0_i32_0 = arith.constant 0 : i32
    %c0_i32_1 = arith.constant 0 : i32
    return %c0_i32, %c0_i32_0 : i32, i32
  }
  func.func @transform_5(%arg0: i32) -> (i32, i32) {
    %c0_i32 = arith.constant 0 : i32
    %c0_i32_0 = arith.constant 0 : i32
    return %arg0, %c0_i32 : i32, i32
  }
}

module attributes {stable_mosaic.version = 11 : i64} {
  func.func @_se_kernel(%arg0: i32, %arg1: memref<16x256xf32, #tpu.memory_space<vmem>>, %arg2: memref<256x4xf32, #tpu.memory_space<vmem>>, %arg3: memref<1x4xf32, #tpu.memory_space<vmem>>, %arg4: memref<4x8xf32, #tpu.memory_space<vmem>>, %arg5: memref<1x8xf32, #tpu.memory_space<vmem>>, %arg6: memref<16x8xf32, #tpu.memory_space<vmem>>) attributes {dimension_semantics = [#tpu.dimension_semantics<parallel>], iteration_bounds = array<i64: 1>, scalar_prefetch = 0 : i64, scratch_operands = 0 : i64, tpu.core_type = #tpu.core_type<tc>, window_params = [{transform_indices = @transform_0, window_bounds = array<i64: 16, 256>}, {pipeline_mode = #tpu.pipeline_mode<synchronous>, transform_indices = @transform_1, window_bounds = array<i64: 256, 4>}, {pipeline_mode = #tpu.pipeline_mode<synchronous>, transform_indices = @transform_2, window_bounds = array<i64: 1, 4>}, {pipeline_mode = #tpu.pipeline_mode<synchronous>, transform_indices = @transform_3, window_bounds = array<i64: 4, 8>}, {pipeline_mode = #tpu.pipeline_mode<synchronous>, transform_indices = @transform_4, window_bounds = array<i64: 1, 8>}, {transform_indices = @transform_5, window_bounds = array<i64: 16, 8>}]} {
    %c0 = arith.constant 0 : index
    %c0_0 = arith.constant 0 : index
    %0 = vector.load %arg1[%c0, %c0_0] : memref<16x256xf32, #tpu.memory_space<vmem>>, vector<16x256xf32>
    %c0_1 = arith.constant 0 : index
    %c0_2 = arith.constant 0 : index
    %1 = vector.load %arg2[%c0_1, %c0_2] : memref<256x4xf32, #tpu.memory_space<vmem>>, vector<256x4xf32>
    %cst = arith.constant dense<0.000000e+00> : vector<16x4xf32>
    %2 = tpu.matmul %0, %1, %cst {dimension_numbers = #tpu.dot_dimension_numbers<[1], [0], [0], [1], [0, 0, 1, 1], [], []>} : vector<16x256xf32>, vector<256x4xf32>, vector<16x4xf32> -> vector<16x4xf32>
    %c0_3 = arith.constant 0 : index
    %c0_4 = arith.constant 0 : index
    %3 = vector.load %arg3[%c0_3, %c0_4] : memref<1x4xf32, #tpu.memory_space<vmem>>, vector<1x4xf32>
    %4 = vector.broadcast %3 : vector<1x4xf32> to vector<16x4xf32>
    %5 = arith.addf %2, %4 : vector<16x4xf32>
    %cst_5 = arith.constant 0.000000e+00 : f32
    %6 = vector.broadcast %cst_5 : f32 to vector<16x4xf32>
    %7 = arith.maximumf %5, %6 : vector<16x4xf32>
    %c0_6 = arith.constant 0 : index
    %c0_7 = arith.constant 0 : index
    %8 = vector.load %arg4[%c0_6, %c0_7] : memref<4x8xf32, #tpu.memory_space<vmem>>, vector<4x8xf32>
    %cst_8 = arith.constant dense<0.000000e+00> : vector<16x8xf32>
    %9 = tpu.matmul %7, %8, %cst_8 {dimension_numbers = #tpu.dot_dimension_numbers<[1], [0], [0], [1], [0, 0, 1, 1], [], []>} : vector<16x4xf32>, vector<4x8xf32>, vector<16x8xf32> -> vector<16x8xf32>
    %c0_9 = arith.constant 0 : index
    %c0_10 = arith.constant 0 : index
    %10 = vector.load %arg5[%c0_9, %c0_10] : memref<1x8xf32, #tpu.memory_space<vmem>>, vector<1x8xf32>
    %11 = vector.broadcast %10 : vector<1x8xf32> to vector<16x8xf32>
    %12 = arith.addf %9, %11 : vector<16x8xf32>
    %13 = arith.negf %12 : vector<16x8xf32>
    %14 = math.exp %13 : vector<16x8xf32>
    %cst_11 = arith.constant 1.000000e+00 : f32
    %15 = vector.broadcast %cst_11 : f32 to vector<16x8xf32>
    %16 = arith.addf %15, %14 : vector<16x8xf32>
    %17 = arith.divf %15, %16 : vector<16x8xf32>
    %c0_12 = arith.constant 0 : index
    %c0_13 = arith.constant 0 : index
    %18 = vector.load %arg6[%c0_12, %c0_13] : memref<16x8xf32, #tpu.memory_space<vmem>>, vector<16x8xf32>
    tpu.vector_store %arg6[%c0_12, %c0_13], %17 {strides = array<i32>} : memref<16x8xf32, #tpu.memory_space<vmem>>, vector<16x8xf32>,
    return
  }
  func.func @transform_0(%arg0: i32) -> (i32, i32) {
    %c0_i32 = arith.constant 0 : i32
    %c0_i32_0 = arith.constant 0 : i32
    return %arg0, %c0_i32 : i32, i32
  }
  func.func @transform_1(%arg0: i32) -> (i32, i32) {
    %c0_i32 = arith.constant 0 : i32
    %c0_i32_0 = arith.constant 0 : i32
    %c0_i32_1 = arith.constant 0 : i32
    return %c0_i32, %c0_i32_0 : i32, i32
  }
  func.func @transform_2(%arg0: i32) -> (i32, i32) {
    %c0_i32 = arith.constant 0 : i32
    %c0_i32_0 = arith.constant 0 : i32
    %c0_i32_1 = arith.constant 0 : i32
    return %c0_i32, %c0_i32_0 : i32, i32
  }
  func.func @transform_3(%arg0: i32) -> (i32, i32) {
    %c0_i32 = arith.constant 0 : i32
    %c0_i32_0 = arith.constant 0 : i32
    %c0_i32_1 = arith.constant 0 : i32
    return %c0_i32, %c0_i32_0 : i32, i32
  }
  func.func @transform_4(%arg0: i32) -> (i32, i32) {
    %c0_i32 = arith.constant 0 : i32
    %c0_i32_0 = arith.constant 0 : i32
    %c0_i32_1 = arith.constant 0 : i32
    return %c0_i32, %c0_i32_0 : i32, i32
  }
  func.func @transform_5(%arg0: i32) -> (i32, i32) {
    %c0_i32 = arith.constant 0 : i32
    %c0_i32_0 = arith.constant 0 : i32
    return %arg0, %c0_i32 : i32, i32
  }
}

</mosaic_0001>

<llo_original>
// kernel: tpu_custom_call.1
$region0: #{tpu_custom_call.1}
  #allocation0 [shape = 'u32[]', space=smem, size = 0x4, offset = 0x4, fixed_abs, tag = 'smem constant byte address 0x4 - core index']
  #allocation1 [shape = 'u32[144,128]{1,0:T(1,128)}', space=vmem, size = 0x12000, scoped, tag = 'internal scratch']
  %s0 = inlined_call_operand.vmem [shape: f32[16,256], index: 0, kind: input, shape index: {}]
  %s1 = inlined_call_operand.vmem [shape: f32[256,4], index: 1, kind: input, shape index: {}]
  %s2 = inlined_call_operand.vmem [shape: f32[1,4], index: 2, kind: input, shape index: {}]
  %s3 = inlined_call_operand.vmem [shape: f32[4,8], index: 3, kind: input, shape index: {}]
  %s4 = inlined_call_operand.vmem [shape: f32[1,8], index: 4, kind: input, shape index: {}]
  %s5 = inlined_call_operand.vmem [shape: f32[16,8], index: 5, kind: output, shape index: {}]
  %s6 = sld [smem:[#allocation0]]
  $region30: #{tpu_custom_call.1} parent=0
    _
  %s8 = ssub.s32 1, %s6
  %s9 = scalar_select 0, %s8, %s6
  // Predicated region
  $region2: #{tpu_custom_call.1} parent=0 // pred_check
    _
  $region3: #{tpu_custom_call.1} parent=0 // pred_check_branch
    %11 = sbr.rel (0) target = $region5
  $region4: #{tpu_custom_call.1} parent=0 // pred_region
    _
  $region5: #{tpu_custom_call.1} parent=0 // pred_fallthru
    _
  // Predicated region
  $region6: #{tpu_custom_call.1} parent=0 // pred_check
    _
  $region7: #{tpu_custom_call.1} parent=0 // pred_check_branch
    %13 = sbr.rel (0) target = $region9
  $region8: #{tpu_custom_call.1} parent=0 // pred_region
    _
  $region9: #{tpu_custom_call.1} parent=0 // pred_fallthru
    _
  // Predicated region
  $region10: #{tpu_custom_call.1} parent=0 // pred_check
    _
  $region11: #{tpu_custom_call.1} parent=0 // pred_check_branch
    %15 = sbr.rel (0) target = $region13
  $region12: #{tpu_custom_call.1} parent=0 // pred_region
    _
  $region13: #{tpu_custom_call.1} parent=0 // pred_fallthru
    _
  // Predicated region
  $region14: #{tpu_custom_call.1} parent=0 // pred_check
    _
  $region15: #{tpu_custom_call.1} parent=0 // pred_check_branch
    %17 = sbr.rel (0) target = $region17
  $region16: #{tpu_custom_call.1} parent=0 // pred_region
    _
  $region17: #{tpu_custom_call.1} parent=0 // pred_fallthru
    _
  // Predicated region
  $region18: #{tpu_custom_call.1} parent=0 // pred_check
    _
  $region19: #{tpu_custom_call.1} parent=0 // pred_check_branch
    %19 = sbr.rel (0) target = $region21
  $region20: #{tpu_custom_call.1} parent=0 // pred_region
    _
  $region21: #{tpu_custom_call.1} parent=0 // pred_fallthru
    _
  %v20 = vld [vmem:[%s0] sm:$0xff]
  %v21 = vld [vmem:[%s0 + $0x8] sm:$0xff]
  %v22 = vld [vmem:[%s0 + $0x10] sm:$0xff]
  %v23 = vld [vmem:[%s0 + $0x18] sm:$0xff]
  %v24 = vld [vmem:[%s1] sm:$0xff]
  %v25 = vld [vmem:[%s1 + $0x8] sm:$0xff]
  %v26 = vld [vmem:[%s1 + $0x10] sm:$0xff]
  %v27 = vld [vmem:[%s1 + $0x18] sm:$0xff]
  %v28 = vld [vmem:[%s1 + $0x20] sm:$0xff]
  %v29 = vld [vmem:[%s1 + $0x28] sm:$0xff]
  %v30 = vld [vmem:[%s1 + $0x30] sm:$0xff]
  %v31 = vld [vmem:[%s1 + $0x38] sm:$0xff]
  %v32 = vld [vmem:[%s1 + $0x40] sm:$0xff]
  %v33 = vld [vmem:[%s1 + $0x48] sm:$0xff]
  %v34 = vld [vmem:[%s1 + $0x50] sm:$0xff]
  %v35 = vld [vmem:[%s1 + $0x58] sm:$0xff]
  %v36 = vld [vmem:[%s1 + $0x60] sm:$0xff]
  %v37 = vld [vmem:[%s1 + $0x68] sm:$0xff]
  %v38 = vld [vmem:[%s1 + $0x70] sm:$0xff]
  %v39 = vld [vmem:[%s1 + $0x78] sm:$0xff]
  %v40 = vld [vmem:[%s1 + $0x80] sm:$0xff]
  %v41 = vld [vmem:[%s1 + $0x88] sm:$0xff]
  %v42 = vld [vmem:[%s1 + $0x90] sm:$0xff]
  %v43 = vld [vmem:[%s1 + $0x98] sm:$0xff]
  %v44 = vld [vmem:[%s1 + $0xa0] sm:$0xff]
  %v45 = vld [vmem:[%s1 + $0xa8] sm:$0xff]
  %v46 = vld [vmem:[%s1 + $0xb0] sm:$0xff]
  %v47 = vld [vmem:[%s1 + $0xb8] sm:$0xff]
  %v48 = vld [vmem:[%s1 + $0xc0] sm:$0xff]
  %v49 = vld [vmem:[%s1 + $0xc8] sm:$0xff]
  %v50 = vld [vmem:[%s1 + $0xd0] sm:$0xff]
  %v51 = vld [vmem:[%s1 + $0xd8] sm:$0xff]
  %v52 = vld [vmem:[%s1 + $0xe0] sm:$0xff]
  %v53 = vld [vmem:[%s1 + $0xe8] sm:$0xff]
  %v54 = vld [vmem:[%s1 + $0xf0] sm:$0xff]
  %v55 = vld [vmem:[%s1 + $0xf8] sm:$0xff]
  %v56 = vld [vmem:[%s2] sm:$0x1]
  %v58 = vlaneseq
  %v59 = vshrl.u32 %v58, 7
  %v60 = vsub.s32 0, %v59
  %v61 = vrot.slane %v56, %v60
  %63 = vmatprep.subr.mxu0 0.0
  %64 = vmatpush1.msra.mxu0 %v24
  %65 = vmatprep.subr.mxu0 0.0
  %66 = vmatpush1.msra.mxu0 %v25
  %67 = vmatprep.subr.mxu0 0.0
  %68 = vmatpush1.msra.mxu0 %v26
  %69 = vmatprep.subr.mxu0 0.0
  %70 = vmatpush1.msra.mxu0 %v27
  %71 = vmatprep.subr.mxu0 0.0
  %72 = vmatpush1.msra.mxu0 %v28
  %73 = vmatprep.subr.mxu0 0.0
  %74 = vmatpush1.msra.mxu0 %v29
  %75 = vmatprep.subr.mxu0 0.0
  %76 = vmatpush1.msra.mxu0 %v30
  %77 = vmatprep.subr.mxu0 0.0
  %78 = vmatpush1.msra.mxu0 %v31
  %79 = vmatprep.subr.mxu0 0.0
  %80 = vmatpush1.msra.mxu0 %v32
  %81 = vmatprep.subr.mxu0 0.0
  %82 = vmatpush1.msra.mxu0 %v33
  %83 = vmatprep.subr.mxu0 0.0
  %84 = vmatpush1.msra.mxu0 %v34
  %85 = vmatprep.subr.mxu0 0.0
  %86 = vmatpush1.msra.mxu0 %v35
  %87 = vmatprep.subr.mxu0 0.0
  %88 = vmatpush1.msra.mxu0 %v36
  %89 = vmatprep.subr.mxu0 0.0
  %90 = vmatpush1.msra.mxu0 %v37
  %91 = vmatprep.subr.mxu0 0.0
  %92 = vmatpush1.msra.mxu0 %v38
  %93 = vmatprep.subr.mxu0 0.0
  %94 = vmatpush1.msra.mxu0 %v39
  %95 = vmatprep.subr.mxu0 0.0
  %96 = vmatpush1.msra.mxu0 %v40
  %97 = vmatprep.subr.mxu0 0.0
  %98 = vmatpush1.msra.mxu0 %v41
  %99 = vmatprep.subr.mxu0 0.0
  %100 = vmatpush1.msra.mxu0 %v42
  %101 = vmatprep.subr.mxu0 0.0
  %102 = vmatpush1.msra.mxu0 %v43
  %103 = vmatprep.subr.mxu0 0.0
  %104 = vmatpush1.msra.mxu0 %v44
  %105 = vmatprep.subr.mxu0 0.0
  %106 = vmatpush1.msra.mxu0 %v45
  %107 = vmatprep.subr.mxu0 0.0
  %108 = vmatpush1.msra.mxu0 %v46
  %109 = vmatprep.subr.mxu0 0.0
  %110 = vmatpush1.msra.mxu0 %v47
  %111 = vmatprep.subr.mxu0 0.0
  %112 = vmatpush1.msra.mxu0 %v48
  %113 = vmatprep.subr.mxu0 0.0
  %114 = vmatpush1.msra.mxu0 %v49
  %115 = vmatprep.subr.mxu0 0.0
  %116 = vmatpush1.msra.mxu0 %v50
  %117 = vmatprep.subr.mxu0 0.0
  %118 = vmatpush1.msra.mxu0 %v51
  %119 = vmatprep.subr.mxu0 0.0
  %120 = vmatpush1.msra.mxu0 %v52
  %121 = vmatprep.subr.mxu0 0.0
  %122 = vmatpush1.msra.mxu0 %v53
  %123 = vmatprep.subr.mxu0 0.0
  %124 = vmatpush1.msra.mxu0 %v54
  %125 = vmatprep.subr.mxu0 0.0
  %126 = vmatpush1.msra.mxu0 %v55
  %127 = vmatprep.mubr.f32.mxu0 %v21
  %128 = vmatmul.mubr.f32.gmra.mrb[0].mxu0 %v20
  %v129 = vpop.f32.mrb[0].mxu0
  %v130 = vadd.f32 %v61, %v129
  %v131 = vpop.f32.mrb[0].mxu0
  %132 = vmatprep.mubr.f32.mxu0 %v23
  %133 = vmatmul.mubr.f32.gmra.mrb[0].mxu0 %v22
  %v134 = vpop.f32.mrb[0].mxu0
  %v135 = vadd.f32 %v61, %v134
  %v136 = vpop.f32.mrb[0].mxu0
  %137 = vdwg.mxu0
  %v138 = vmax.f32 %v130, 0.0
  %v139 = vmax.f32 %v135, 0.0
  %v140 = vld [vmem:[%s3] sm:$0xf]
  %v141 = vld [vmem:[%s4] sm:$0x1]
  %v143 = vlaneseq
  %v144 = vshrl.u32 %v143, 7
  %v145 = vsub.s32 0, %v144
  %v146 = vrot.slane %v141, %v145
  %vm148 = vcmask 31744
  %v150 = vsel %vm148, %v138, 0
  %v153 = vsel %vm148, %v139, 0
  %vm155 = vcmask 1043456
  %v157 = vsel %vm155, %v140, 0
  %159 = vmatprep.subr.mxu0 0.0
  %160 = vmatpush1.msra.mxu0 %v157
  %161 = vmatprep.subr.mxu0 0.0
  %162 = vmatpush1.msra.mxu0 0.0
  %163 = vmatprep.subr.mxu0 0.0
  %164 = vmatpush1.msra.mxu0 0.0
  %165 = vmatprep.subr.mxu0 0.0
  %166 = vmatpush1.msra.mxu0 0.0
  %167 = vmatprep.subr.mxu0 0.0
  %168 = vmatpush1.msra.mxu0 0.0
  %169 = vmatprep.subr.mxu0 0.0
  %170 = vmatpush1.msra.mxu0 0.0
  %171 = vmatprep.subr.mxu0 0.0
  %172 = vmatpush1.msra.mxu0 0.0
  %173 = vmatprep.subr.mxu0 0.0
  %174 = vmatpush1.msra.mxu0 0.0
  %175 = vmatprep.subr.mxu0 0.0
  %176 = vmatpush1.msra.mxu0 0.0
  %177 = vmatprep.subr.mxu0 0.0
  %178 = vmatpush1.msra.mxu0 0.0
  %179 = vmatprep.subr.mxu0 0.0
  %180 = vmatpush1.msra.mxu0 0.0
  %181 = vmatprep.subr.mxu0 0.0
  %182 = vmatpush1.msra.mxu0 0.0
  %183 = vmatprep.subr.mxu0 0.0
  %184 = vmatpush1.msra.mxu0 0.0
  %185 = vmatprep.subr.mxu0 0.0
  %186 = vmatpush1.msra.mxu0 0.0
  %187 = vmatprep.subr.mxu0 0.0
  %188 = vmatpush1.msra.mxu0 0.0
  %189 = vmatprep.subr.mxu0 0.0
  %190 = vmatpush1.msra.mxu0 0.0
  %191 = vmatprep.subr.mxu0 0.0
  %192 = vmatpush1.msra.mxu0 0.0
  %193 = vmatprep.subr.mxu0 0.0
  %194 = vmatpush1.msra.mxu0 0.0
  %195 = vmatprep.subr.mxu0 0.0
  %196 = vmatpush1.msra.mxu0 0.0
  %197 = vmatprep.subr.mxu0 0.0
  %198 = vmatpush1.msra.mxu0 0.0
  %199 = vmatprep.subr.mxu0 0.0
  %200 = vmatpush1.msra.mxu0 0.0
  %201 = vmatprep.subr.mxu0 0.0
  %202 = vmatpush1.msra.mxu0 0.0
  %203 = vmatprep.subr.mxu0 0.0
  %204 = vmatpush1.msra.mxu0 0.0
  %205 = vmatprep.subr.mxu0 0.0
  %206 = vmatpush1.msra.mxu0 0.0
  %207 = vmatprep.subr.mxu0 0.0
  %208 = vmatpush1.msra.mxu0 0.0
  %209 = vmatprep.subr.mxu0 0.0
  %210 = vmatpush1.msra.mxu0 0.0
  %211 = vmatprep.subr.mxu0 0.0
  %212 = vmatpush1.msra.mxu0 0.0
  %213 = vmatprep.subr.mxu0 0.0
  %214 = vmatpush1.msra.mxu0 0.0
  %215 = vmatprep.subr.mxu0 0.0
  %216 = vmatpush1.msra.mxu0 0.0
  %217 = vmatprep.subr.mxu0 0.0
  %218 = vmatpush1.msra.mxu0 0.0
  %219 = vmatprep.subr.mxu0 0.0
  %220 = vmatpush1.msra.mxu0 0.0
  %221 = vmatprep.subr.mxu0 0.0
  %222 = vmatpush1.msra.mxu0 0.0
  %223 = vmatprep.mubr.f32.mxu0 0.0
  %224 = vmatmul.mubr.f32.gmra.mrb[0].mxu0 %v150
  %v225 = vpop.f32.mrb[0].mxu0
  %v226 = vadd.f32 %v146, %v225
  %v227 = vpop.f32.mrb[0].mxu0
  %228 = vmatprep.mubr.f32.mxu0 0.0
  %229 = vmatmul.mubr.f32.gmra.mrb[0].mxu0 %v153
  %v230 = vpop.f32.mrb[0].mxu0
  %v231 = vadd.f32 %v146, %v230
  %v232 = vpop.f32.mrb[0].mxu0
  %233 = vdwg.mxu0
  %v234 = vxor.u32 %v226, 2147483648
  %v235 = vxor.u32 %v231, 2147483648
  %v236 = vmul.f32 %v234, 1.442695
  %v237 = vpow.pop %v236
  %v238 = vmul.f32 %v235, 1.442695
  %v239 = vpow.pop %v238
  %v240 = vadd.f32 %v237, 1.0
  %v241 = vadd.f32 %v239, 1.0
  %v242 = vrcp.pop %v240
  %v243 = vmul.f32 1.0, %v242
  %v244 = vrcp.pop %v241
  %v245 = vmul.f32 1.0, %v244
  %vm246 = vcmask 64512
  %247 = vst.msk [vmem:[%s5] sm:$0xff] %vm246, %v243
  %248 = vst.msk [vmem:[%s5 + $0x8] sm:$0xff] %vm246, %v245
  // Predicated region
  $region22: #{tpu_custom_call.1} parent=0 // pred_check
    _
  $region23: #{tpu_custom_call.1} parent=0 // pred_check_branch
    %250 = sbr.rel (0) target = $region25
  $region24: #{tpu_custom_call.1} parent=0 // pred_region
    _
  $region25: #{tpu_custom_call.1} parent=0 // pred_fallthru
    _
  // Predicated region
  $region26: #{tpu_custom_call.1} parent=0 // pred_check
    _
  $region27: #{tpu_custom_call.1} parent=0 // pred_check_branch
    %252 = sbr.rel (0) target = $region29
  $region28: #{tpu_custom_call.1} parent=0 // pred_region
    _
  $region29: #{tpu_custom_call.1} parent=0 // pred_fallthru
    _

// kernel: tpu_custom_call.1
$region0: #{tpu_custom_call.1}
  #allocation0 [shape = 'u32[]', space=smem, size = 0x4, offset = 0x4, fixed_abs, tag = 'smem constant byte address 0x4 - core index']
  #allocation1 [shape = 'u32[144,128]{1,0:T(1,128)}', space=vmem, size = 0x12000, scoped, tag = 'internal scratch']
  %s0 = inlined_call_operand.vmem [shape: f32[16,256], index: 0, kind: input, shape index: {}]
  %s1 = inlined_call_operand.vmem [shape: f32[256,4], index: 1, kind: input, shape index: {}]
  %s2 = inlined_call_operand.vmem [shape: f32[1,4], index: 2, kind: input, shape index: {}]
  %s3 = inlined_call_operand.vmem [shape: f32[4,8], index: 3, kind: input, shape index: {}]
  %s4 = inlined_call_operand.vmem [shape: f32[1,8], index: 4, kind: input, shape index: {}]
  %s5 = inlined_call_operand.vmem [shape: f32[16,8], index: 5, kind: output, shape index: {}]
  %s6 = sld [smem:[#allocation0]]
  $region30: #{tpu_custom_call.1} parent=0
    _
  %s8 = ssub.s32 1, %s6
  %s9 = scalar_select 0, %s8, %s6
  // Predicated region
  $region2: #{tpu_custom_call.1} parent=0 // pred_check
    _
  $region3: #{tpu_custom_call.1} parent=0 // pred_check_branch
    %11 = sbr.rel (0) target = $region5
  $region4: #{tpu_custom_call.1} parent=0 // pred_region
    _
  $region5: #{tpu_custom_call.1} parent=0 // pred_fallthru
    _
  // Predicated region
  $region6: #{tpu_custom_call.1} parent=0 // pred_check
    _
  $region7: #{tpu_custom_call.1} parent=0 // pred_check_branch
    %13 = sbr.rel (0) target = $region9
  $region8: #{tpu_custom_call.1} parent=0 // pred_region
    _
  $region9: #{tpu_custom_call.1} parent=0 // pred_fallthru
    _
  // Predicated region
  $region10: #{tpu_custom_call.1} parent=0 // pred_check
    _
  $region11: #{tpu_custom_call.1} parent=0 // pred_check_branch
    %15 = sbr.rel (0) target = $region13
  $region12: #{tpu_custom_call.1} parent=0 // pred_region
    _
  $region13: #{tpu_custom_call.1} parent=0 // pred_fallthru
    _
  // Predicated region
  $region14: #{tpu_custom_call.1} parent=0 // pred_check
    _
  $region15: #{tpu_custom_call.1} parent=0 // pred_check_branch
    %17 = sbr.rel (0) target = $region17
  $region16: #{tpu_custom_call.1} parent=0 // pred_region
    _
  $region17: #{tpu_custom_call.1} parent=0 // pred_fallthru
    _
  // Predicated region
  $region18: #{tpu_custom_call.1} parent=0 // pred_check
    _
  $region19: #{tpu_custom_call.1} parent=0 // pred_check_branch
    %19 = sbr.rel (0) target = $region21
  $region20: #{tpu_custom_call.1} parent=0 // pred_region
    _
  $region21: #{tpu_custom_call.1} parent=0 // pred_fallthru
    _
  %v20 = vld [vmem:[%s0] sm:$0xff]
  %v21 = vld [vmem:[%s0 + $0x8] sm:$0xff]
  %v22 = vld [vmem:[%s0 + $0x10] sm:$0xff]
  %v23 = vld [vmem:[%s0 + $0x18] sm:$0xff]
  %v24 = vld [vmem:[%s1] sm:$0xff]
  %v25 = vld [vmem:[%s1 + $0x8] sm:$0xff]
  %v26 = vld [vmem:[%s1 + $0x10] sm:$0xff]
  %v27 = vld [vmem:[%s1 + $0x18] sm:$0xff]
  %v28 = vld [vmem:[%s1 + $0x20] sm:$0xff]
  %v29 = vld [vmem:[%s1 + $0x28] sm:$0xff]
  %v30 = vld [vmem:[%s1 + $0x30] sm:$0xff]
  %v31 = vld [vmem:[%s1 + $0x38] sm:$0xff]
  %v32 = vld [vmem:[%s1 + $0x40] sm:$0xff]
  %v33 = vld [vmem:[%s1 + $0x48] sm:$0xff]
  %v34 = vld [vmem:[%s1 + $0x50] sm:$0xff]
  %v35 = vld [vmem:[%s1 + $0x58] sm:$0xff]
  %v36 = vld [vmem:[%s1 + $0x60] sm:$0xff]
  %v37 = vld [vmem:[%s1 + $0x68] sm:$0xff]
  %v38 = vld [vmem:[%s1 + $0x70] sm:$0xff]
  %v39 = vld [vmem:[%s1 + $0x78] sm:$0xff]
  %v40 = vld [vmem:[%s1 + $0x80] sm:$0xff]
  %v41 = vld [vmem:[%s1 + $0x88] sm:$0xff]
  %v42 = vld [vmem:[%s1 + $0x90] sm:$0xff]
  %v43 = vld [vmem:[%s1 + $0x98] sm:$0xff]
  %v44 = vld [vmem:[%s1 + $0xa0] sm:$0xff]
  %v45 = vld [vmem:[%s1 + $0xa8] sm:$0xff]
  %v46 = vld [vmem:[%s1 + $0xb0] sm:$0xff]
  %v47 = vld [vmem:[%s1 + $0xb8] sm:$0xff]
  %v48 = vld [vmem:[%s1 + $0xc0] sm:$0xff]
  %v49 = vld [vmem:[%s1 + $0xc8] sm:$0xff]
  %v50 = vld [vmem:[%s1 + $0xd0] sm:$0xff]
  %v51 = vld [vmem:[%s1 + $0xd8] sm:$0xff]
  %v52 = vld [vmem:[%s1 + $0xe0] sm:$0xff]
  %v53 = vld [vmem:[%s1 + $0xe8] sm:$0xff]
  %v54 = vld [vmem:[%s1 + $0xf0] sm:$0xff]
  %v55 = vld [vmem:[%s1 + $0xf8] sm:$0xff]
  %v56 = vld [vmem:[%s2] sm:$0x1]
  %v58 = vlaneseq
  %v59 = vshrl.u32 %v58, 7
  %v60 = vsub.s32 0, %v59
  %v61 = vrot.slane %v56, %v60
  %63 = vmatprep.subr.mxu0 0.0
  %64 = vmatpush1.msra.mxu0 %v24
  %65 = vmatprep.subr.mxu0 0.0
  %66 = vmatpush1.msra.mxu0 %v25
  %67 = vmatprep.subr.mxu0 0.0
  %68 = vmatpush1.msra.mxu0 %v26
  %69 = vmatprep.subr.mxu0 0.0
  %70 = vmatpush1.msra.mxu0 %v27
  %71 = vmatprep.subr.mxu0 0.0
  %72 = vmatpush1.msra.mxu0 %v28
  %73 = vmatprep.subr.mxu0 0.0
  %74 = vmatpush1.msra.mxu0 %v29
  %75 = vmatprep.subr.mxu0 0.0
  %76 = vmatpush1.msra.mxu0 %v30
  %77 = vmatprep.subr.mxu0 0.0
  %78 = vmatpush1.msra.mxu0 %v31
  %79 = vmatprep.subr.mxu0 0.0
  %80 = vmatpush1.msra.mxu0 %v32
  %81 = vmatprep.subr.mxu0 0.0
  %82 = vmatpush1.msra.mxu0 %v33
  %83 = vmatprep.subr.mxu0 0.0
  %84 = vmatpush1.msra.mxu0 %v34
  %85 = vmatprep.subr.mxu0 0.0
  %86 = vmatpush1.msra.mxu0 %v35
  %87 = vmatprep.subr.mxu0 0.0
  %88 = vmatpush1.msra.mxu0 %v36
  %89 = vmatprep.subr.mxu0 0.0
  %90 = vmatpush1.msra.mxu0 %v37
  %91 = vmatprep.subr.mxu0 0.0
  %92 = vmatpush1.msra.mxu0 %v38
  %93 = vmatprep.subr.mxu0 0.0
  %94 = vmatpush1.msra.mxu0 %v39
  %95 = vmatprep.subr.mxu0 0.0
  %96 = vmatpush1.msra.mxu0 %v40
  %97 = vmatprep.subr.mxu0 0.0
  %98 = vmatpush1.msra.mxu0 %v41
  %99 = vmatprep.subr.mxu0 0.0
  %100 = vmatpush1.msra.mxu0 %v42
  %101 = vmatprep.subr.mxu0 0.0
  %102 = vmatpush1.msra.mxu0 %v43
  %103 = vmatprep.subr.mxu0 0.0
  %104 = vmatpush1.msra.mxu0 %v44
  %105 = vmatprep.subr.mxu0 0.0
  %106 = vmatpush1.msra.mxu0 %v45
  %107 = vmatprep.subr.mxu0 0.0
  %108 = vmatpush1.msra.mxu0 %v46
  %109 = vmatprep.subr.mxu0 0.0
  %110 = vmatpush1.msra.mxu0 %v47
  %111 = vmatprep.subr.mxu0 0.0
  %112 = vmatpush1.msra.mxu0 %v48
  %113 = vmatprep.subr.mxu0 0.0
  %114 = vmatpush1.msra.mxu0 %v49
  %115 = vmatprep.subr.mxu0 0.0
  %116 = vmatpush1.msra.mxu0 %v50
  %117 = vmatprep.subr.mxu0 0.0
  %118 = vmatpush1.msra.mxu0 %v51
  %119 = vmatprep.subr.mxu0 0.0
  %120 = vmatpush1.msra.mxu0 %v52
  %121 = vmatprep.subr.mxu0 0.0
  %122 = vmatpush1.msra.mxu0 %v53
  %123 = vmatprep.subr.mxu0 0.0
  %124 = vmatpush1.msra.mxu0 %v54
  %125 = vmatprep.subr.mxu0 0.0
  %126 = vmatpush1.msra.mxu0 %v55
  %127 = vmatprep.mubr.f32.mxu0 %v21
  %128 = vmatmul.mubr.f32.gmra.mrb[0].mxu0 %v20
  %v129 = vpop.f32.mrb[0].mxu0
  %v130 = vadd.f32 %v61, %v129
  %v131 = vpop.f32.mrb[0].mxu0
  %132 = vmatprep.mubr.f32.mxu0 %v23
  %133 = vmatmul.mubr.f32.gmra.mrb[0].mxu0 %v22
  %v134 = vpop.f32.mrb[0].mxu0
  %v135 = vadd.f32 %v61, %v134
  %v136 = vpop.f32.mrb[0].mxu0
  %137 = vdwg.mxu0
  %v138 = vmax.f32 %v130, 0.0
  %v139 = vmax.f32 %v135, 0.0
  %v140 = vld [vmem:[%s3] sm:$0xf]
  %v141 = vld [vmem:[%s4] sm:$0x1]
  %v143 = vlaneseq
  %v144 = vshrl.u32 %v143, 7
  %v145 = vsub.s32 0, %v144
  %v146 = vrot.slane %v141, %v145
  %vm148 = vcmask 31744
  %v150 = vsel %vm148, %v138, 0
  %v153 = vsel %vm148, %v139, 0
  %vm155 = vcmask 1043456
  %v157 = vsel %vm155, %v140, 0
  %159 = vmatprep.subr.mxu0 0.0
  %160 = vmatpush1.msra.mxu0 %v157
  %161 = vmatprep.subr.mxu0 0.0
  %162 = vmatpush1.msra.mxu0 0.0
  %163 = vmatprep.subr.mxu0 0.0
  %164 = vmatpush1.msra.mxu0 0.0
  %165 = vmatprep.subr.mxu0 0.0
  %166 = vmatpush1.msra.mxu0 0.0
  %167 = vmatprep.subr.mxu0 0.0
  %168 = vmatpush1.msra.mxu0 0.0
  %169 = vmatprep.subr.mxu0 0.0
  %170 = vmatpush1.msra.mxu0 0.0
  %171 = vmatprep.subr.mxu0 0.0
  %172 = vmatpush1.msra.mxu0 0.0
  %173 = vmatprep.subr.mxu0 0.0
  %174 = vmatpush1.msra.mxu0 0.0
  %175 = vmatprep.subr.mxu0 0.0
  %176 = vmatpush1.msra.mxu0 0.0
  %177 = vmatprep.subr.mxu0 0.0
  %178 = vmatpush1.msra.mxu0 0.0
  %179 = vmatprep.subr.mxu0 0.0
  %180 = vmatpush1.msra.mxu0 0.0
  %181 = vmatprep.subr.mxu0 0.0
  %182 = vmatpush1.msra.mxu0 0.0
  %183 = vmatprep.subr.mxu0 0.0
  %184 = vmatpush1.msra.mxu0 0.0
  %185 = vmatprep.subr.mxu0 0.0
  %186 = vmatpush1.msra.mxu0 0.0
  %187 = vmatprep.subr.mxu0 0.0
  %188 = vmatpush1.msra.mxu0 0.0
  %189 = vmatprep.subr.mxu0 0.0
  %190 = vmatpush1.msra.mxu0 0.0
  %191 = vmatprep.subr.mxu0 0.0
  %192 = vmatpush1.msra.mxu0 0.0
  %193 = vmatprep.subr.mxu0 0.0
  %194 = vmatpush1.msra.mxu0 0.0
  %195 = vmatprep.subr.mxu0 0.0
  %196 = vmatpush1.msra.mxu0 0.0
  %197 = vmatprep.subr.mxu0 0.0
  %198 = vmatpush1.msra.mxu0 0.0
  %199 = vmatprep.subr.mxu0 0.0
  %200 = vmatpush1.msra.mxu0 0.0
  %201 = vmatprep.subr.mxu0 0.0
  %202 = vmatpush1.msra.mxu0 0.0
  %203 = vmatprep.subr.mxu0 0.0
  %204 = vmatpush1.msra.mxu0 0.0
  %205 = vmatprep.subr.mxu0 0.0
  %206 = vmatpush1.msra.mxu0 0.0
  %207 = vmatprep.subr.mxu0 0.0
  %208 = vmatpush1.msra.mxu0 0.0
  %209 = vmatprep.subr.mxu0 0.0
  %210 = vmatpush1.msra.mxu0 0.0
  %211 = vmatprep.subr.mxu0 0.0
  %212 = vmatpush1.msra.mxu0 0.0
  %213 = vmatprep.subr.mxu0 0.0
  %214 = vmatpush1.msra.mxu0 0.0
  %215 = vmatprep.subr.mxu0 0.0
  %216 = vmatpush1.msra.mxu0 0.0
  %217 = vmatprep.subr.mxu0 0.0
  %218 = vmatpush1.msra.mxu0 0.0
  %219 = vmatprep.subr.mxu0 0.0
  %220 = vmatpush1.msra.mxu0 0.0
  %221 = vmatprep.subr.mxu0 0.0
  %222 = vmatpush1.msra.mxu0 0.0
  %223 = vmatprep.mubr.f32.mxu0 0.0
  %224 = vmatmul.mubr.f32.gmra.mrb[0].mxu0 %v150
  %v225 = vpop.f32.mrb[0].mxu0
  %v226 = vadd.f32 %v146, %v225
  %v227 = vpop.f32.mrb[0].mxu0
  %228 = vmatprep.mubr.f32.mxu0 0.0
  %229 = vmatmul.mubr.f32.gmra.mrb[0].mxu0 %v153
  %v230 = vpop.f32.mrb[0].mxu0
  %v231 = vadd.f32 %v146, %v230
  %v232 = vpop.f32.mrb[0].mxu0
  %233 = vdwg.mxu0
  %v234 = vxor.u32 %v226, 2147483648
  %v235 = vxor.u32 %v231, 2147483648
  %v236 = vmul.f32 %v234, 1.442695
  %v237 = vpow.pop %v236
  %v238 = vmul.f32 %v235, 1.442695
  %v239 = vpow.pop %v238
  %v240 = vadd.f32 %v237, 1.0
  %v241 = vadd.f32 %v239, 1.0
  %v242 = vrcp.pop %v240
  %v243 = vmul.f32 1.0, %v242
  %v244 = vrcp.pop %v241
  %v245 = vmul.f32 1.0, %v244
  %vm246 = vcmask 64512
  %247 = vst.msk [vmem:[%s5] sm:$0xff] %vm246, %v243
  %248 = vst.msk [vmem:[%s5 + $0x8] sm:$0xff] %vm246, %v245
  // Predicated region
  $region22: #{tpu_custom_call.1} parent=0 // pred_check
    _
  $region23: #{tpu_custom_call.1} parent=0 // pred_check_branch
    %250 = sbr.rel (0) target = $region25
  $region24: #{tpu_custom_call.1} parent=0 // pred_region
    _
  $region25: #{tpu_custom_call.1} parent=0 // pred_fallthru
    _
  // Predicated region
  $region26: #{tpu_custom_call.1} parent=0 // pred_check
    _
  $region27: #{tpu_custom_call.1} parent=0 // pred_check_branch
    %252 = sbr.rel (0) target = $region29
  $region28: #{tpu_custom_call.1} parent=0 // pred_region
    _
  $region29: #{tpu_custom_call.1} parent=0 // pred_fallthru
    _

</llo_original>
